<compile_context>
chip_gen: v6e
topology: v6e:2x2x1
jax: 0.10.0
libtpu: 0.0.40
codegen_flags: <defaults>
</compile_context>

<pallas_src>
import functools

import jax
import jax.numpy as jnp
from jax import lax
from jax.experimental import pallas as pl
from jax.experimental.pallas import tpu as pltpu

_MB = 1024 * 1024


def _vmem_ceiling_bytes():
    """Physical VMEM minus headroom, generation-gated (fallback: v7x 64 MiB)."""
    cap = 64 * _MB
    try:
        info = pltpu.get_tpu_info()
        cap = int(getattr(info, "vmem_capacity_bytes", cap))
    except Exception:
        pass
    # Never request the entire physical VMEM: leave room for compiler scratch
    # and the double-buffered pipeline slabs.
    return max(32 * _MB, int(cap * 0.85))


def _vmem_limit_bytes(per_step_bytes, ceiling):
    # ~2x for double-buffered pipelining, clamped to [32 MiB, ceiling].
    return int(min(max(2 * per_step_bytes, 32 * _MB), ceiling))


def _pick_block(n, candidates, step_bytes_fn=None, budget=None):
    """Largest candidate dividing n whose per-step footprint fits the budget."""
    divisors = [c for c in candidates if c <= n and n % c == 0]
    if not divisors:
        return n
    if step_bytes_fn is not None and budget is not None:
        for c in divisors:                      # descending order
            if step_bytes_fn(c) <= budget:
                return c
        return divisors[-1]                     # nothing fits: best effort
    return divisors[0]


# ---------------------------------------------------------------------------
# Kernel 1: fused qkv linear + split + stride-2 spatial subsample of k/v
# ---------------------------------------------------------------------------
def _qkv_subsample_kernel(x_ref, w_ref, q_ref, k_ref, v_ref):
    # x_ref: [bm2, 2*D] -- row i holds the (even, odd) spatial-token pair
    # (tokens 2i, 2i+1); columns [0, D) = even token (kept by the subsample).
    # w_ref: [D, 3*D] qkv weight (q columns pre-scaled by the softmax scale).
    d = w_ref.shape[0]
    w = w_ref[...]
    x_even = x_ref[:, :d].astype(w.dtype)       # bf16 into the MXU
    x_odd = x_ref[:, d:].astype(w.dtype)
    # One wide MXU pass: q_even | k | v for the kept (even) tokens.
    ekv = jnp.dot(x_even, w, preferred_element_type=jnp.float32)       # [bm2,3D]
    # q is also needed for the odd tokens (narrow pass over the q columns).
    q_odd = jnp.dot(x_odd, w[:, :d], preferred_element_type=jnp.float32)
    q_ref[:, :d] = ekv[:, :d].astype(q_ref.dtype)
    q_ref[:, d:] = q_odd.astype(q_ref.dtype)
    k_ref[...] = ekv[:, d:2 * d].astype(k_ref.dtype)
    v_ref[...] = ekv[:, 2 * d:].astype(v_ref.dtype)


def qkv_subsample_pallas(x_pairs, w, out_dtype):
    M2, twoD = x_pairs.shape
    D = w.shape[0]
    assert twoD == 2 * D and w.shape[1] == 3 * D
    ceiling = _vmem_ceiling_bytes()
    x_it = x_pairs.dtype.itemsize
    w_it = w.dtype.itemsize
    o_it = jnp.dtype(out_dtype).itemsize

    def step_bytes(bm2):
        return (bm2 * 2 * D * x_it            # x tile
                + 3 * D * D * w_it            # resident weights
                + bm2 * 2 * D * o_it          # q out tile
                + 2 * bm2 * D * o_it          # k, v out tiles
                + bm2 * 4 * D * 4)            # f32 matmul temporaries

    bm2 = _pick_block(M2, (1024, 512, 256, 128, 64, 32, 16, 8),
                      step_bytes_fn=step_bytes, budget=(ceiling * 2) // 5)
    flops = 8 * M2 * D * D                    # q on 2*M2 rows + k,v on M2 rows each
    bytes_acc = (M2 * 2 * D * x_it + 3 * D * D * w_it
                 + M2 * 2 * D * o_it + 2 * M2 * D * o_it)
    return pl.pallas_call(
        _qkv_subsample_kernel,
        out_shape=(
            jax.ShapeDtypeStruct((M2, 2 * D), out_dtype),   # q (all tokens)
            jax.ShapeDtypeStruct((M2, D), out_dtype),       # k (subsampled)
            jax.ShapeDtypeStruct((M2, D), out_dtype),       # v (subsampled)
        ),
        grid=(M2 // bm2,),
        in_specs=[
            pl.BlockSpec((bm2, 2 * D), lambda i: (i, 0)),
            pl.BlockSpec((D, 3 * D), lambda i: (0, 0)),     # weights stay resident
        ],
        out_specs=(
            pl.BlockSpec((bm2, 2 * D), lambda i: (i, 0)),
            pl.BlockSpec((bm2, D), lambda i: (i, 0)),
            pl.BlockSpec((bm2, D), lambda i: (i, 0)),
        ),
        compiler_params=pltpu.CompilerParams(
            dimension_semantics=("parallel",),
            vmem_limit_bytes=_vmem_limit_bytes(step_bytes(bm2), ceiling)),
        cost_estimate=pl.CostEstimate(
            flops=int(flops), transcendentals=0, bytes_accessed=int(bytes_acc)),
    )(x_pairs, w)


# ---------------------------------------------------------------------------
# Kernel 2: spatiotemporal attention fused with the output projection
#           grid = (batch, Q-tile); k/v + proj weights VMEM-resident
# ---------------------------------------------------------------------------
def _attn_proj_kernel(num_heads, q_ref, k_ref, v_ref, wp_ref, bp_ref, o_ref,
                      acc_ref):
    # q_ref: [bq, D]; k_ref/v_ref: [K, D] (heads packed on the lane axis)
    # wp_ref: [D, D]; bp_ref: [1, D] (f32); acc_ref: [bq, D] f32 scratch
    D = q_ref.shape[-1]
    hd = D // num_heads
    q = q_ref[...]                            # bf16, scale already folded into wq
    k = k_ref[...]
    v = v_ref[...]
    for h in range(num_heads):                # static unroll; 2-D MXU matmuls
        sl = slice(h * hd, (h + 1) * hd)
        s = lax.dot_general(q[:, sl], k[:, sl], (((1,), (1,)), ((), ())),
                            preferred_element_type=jnp.float32)        # [bq, K]
        s = s - jnp.max(s, axis=-1, keepdims=True)
        p = jnp.exp(s)                                                 # f32 EUP
        # Normalize AFTER the PV matmul: Q*hd multiplies instead of Q*K.
        r = pl.reciprocal(jnp.sum(p, axis=-1, keepdims=True), approx=True)
        ph = jnp.dot(p.astype(v.dtype), v[:, sl],
                     preferred_element_type=jnp.float32)               # [bq, hd]
        acc_ref[:, sl] = ph * r               # per-head store, no concat
    # Fused output projection: merged-head activation never leaves VMEM.
    a = acc_ref[...].astype(wp_ref.dtype)
    out = jnp.dot(a, wp_ref[...], preferred_element_type=jnp.float32) + bp_ref[...]
    o_ref[...] = out.astype(o_ref.dtype)      # single lane-dense [bq, D] store


def attention_proj_pallas(q, k, v, w_proj, b_proj, num_heads, out_dtype):
    N, Q, D = q.shape
    K = k.shape[1]
    ceiling = _vmem_ceiling_bytes()
    a_it = q.dtype.itemsize
    o_it = jnp.dtype(out_dtype).itemsize

    def step_bytes(bq):
        # Only ONE head's [bq, K] score slab is live at a time.
        return ((bq * D + 2 * K * D + D * D) * a_it   # q, k, v, w_proj
                + D * 4                               # bias
                + bq * K * 4                          # score slab (f32)
                + bq * D * 4                          # acc scratch (f32)
                + bq * D * o_it)                      # projected out tile

    bq = _pick_block(Q, (1024, 512, 256, 128, 64, 32, 16, 8),
                     step_bytes_fn=step_bytes, budget=(ceiling * 2) // 5)

    flops = 4 * N * Q * K * D + 2 * N * Q * D * D     # qk^T + pv + proj
    trans = N * num_heads * Q * K                     # exp
    bytes_acc = ((N * Q * D + 2 * N * K * D) * a_it + D * D * a_it + D * 4
                 + N * Q * D * o_it)
    kernel = functools.partial(_attn_proj_kernel, num_heads)
    return pl.pallas_call(
        kernel,
        out_shape=jax.ShapeDtypeStruct((N, Q, D), out_dtype),
        grid=(N, Q // bq),
        in_specs=[
            pl.BlockSpec((None, bq, D), lambda n, qi: (n, qi, 0)),
            pl.BlockSpec((None, K, D), lambda n, qi: (n, 0, 0)),   # resident over Q tiles
            pl.BlockSpec((None, K, D), lambda n, qi: (n, 0, 0)),
            pl.BlockSpec((D, D), lambda n, qi: (0, 0)),            # w_proj resident
            pl.BlockSpec((1, D), lambda n, qi: (0, 0)),            # b_proj resident
        ],
        out_specs=pl.BlockSpec((None, bq, D), lambda n, qi: (n, qi, 0)),
        scratch_shapes=[pltpu.VMEM((bq, D), jnp.float32)],
        compiler_params=pltpu.CompilerParams(
            dimension_semantics=("parallel", "parallel"),
            vmem_limit_bytes=_vmem_limit_bytes(step_bytes(bq), ceiling)),
        cost_estimate=pl.CostEstimate(
            flops=int(flops), transcendentals=int(trans),
            bytes_accessed=int(bytes_acc)),
    )(q, k, v, w_proj, b_proj)


# ---------------------------------------------------------------------------
# AttentionSubsample forward (only free metadata reshapes between kernels)
# ---------------------------------------------------------------------------
def subsample_func(y):
    # Concrete stand-in for the abstract base-class method:
    # stride-2 subsampling over spatial tokens.
    return y[:, :, ::2, :]


def attention_subsample_forward(x, w_qkv, w_proj, b_proj, num_heads,
                                compute_dtype=jnp.bfloat16):
    N, T, S, D = x.shape
    assert S % 2 == 0 and D % num_heads == 0
    R = S // 2
    hd = D // num_heads
    scale = hd ** (-0.5)
    M = N * T * S

    # One-time weight-side ops (amortized over all tokens):
    #   * fold the softmax scale into the q columns of the qkv weight,
    #   * cast the weights to the bf16 MXU compute dtype.
    w = jnp.concatenate([w_qkv[:, :D] * scale, w_qkv[:, D:]],
                        axis=1).astype(compute_dtype)
    w_proj_c = w_proj.astype(compute_dtype)
    b_proj_2d = b_proj.astype(jnp.float32).reshape(1, D)

    # View tokens as (even, odd) spatial pairs -- free, contiguous reshape.
    x_pairs = x.reshape(M // 2, 2 * D)
    q2, k2, v2 = qkv_subsample_pallas(x_pairs, w, out_dtype=compute_dtype)

    q = q2.reshape(N, T * S, D)      # all tokens, original order (free reshape)
    k = k2.reshape(N, T * R, D)      # subsampled (even-s) tokens
    v = v2.reshape(N, T * R, D)

    # Attention + output projection fused (no HBM round-trip of `o`).
    out = attention_proj_pallas(q, k, v, w_proj_c, b_proj_2d, num_heads,
                                out_dtype=x.dtype)
    return out.reshape(N, T, S, D)   # proj_drop is identity (p = 0.0)


# ---------------------------------------------------------------------------
# Pure-JAX reference (mirrors the PyTorch forward) for a sanity check
# ---------------------------------------------------------------------------
def reference_forward(x, w_qkv, w_proj, b_proj, num_heads):
    N, T, S, D = x.shape
    hd = D // num_heads
    scale = hd ** (-0.5)
    qkv = jnp.einsum("ntsd,de->ntse", x, w_qkv, precision="highest")
    q, k, v = jnp.split(qkv, 3, axis=-1)
    k = subsample_func(k)
    v = subsample_func(v)
    q_ = q.reshape(N, -1, num_heads, hd)
    k_ = k.reshape(N, -1, num_heads, hd)
    v_ = v.reshape(N, -1, num_heads, hd)
    attn = jnp.einsum("nqhd,nkhd->nqkh", q_, k_, precision="highest") * scale
    attn = jax.nn.softmax(attn, axis=-2)
    o = jnp.einsum("nqkh,nkhd->nqhd", attn, v_, precision="highest")
    o = o.reshape(N, T, S, D)
    return jnp.einsum("ntsd,de->ntse", o, w_proj, precision="highest") + b_proj


# ---------------------------------------------------------------------------
if __name__ == "__main__":
    # small shapes consistent with the module: x is [N, T, S, D]
    N, T, S, D = 2, 2, 16, 64
    num_heads = 8

    key = jax.random.PRNGKey(0)
    kx, kq, kp, kb = jax.random.split(key, 4)
    x = jax.random.normal(kx, (N, T, S, D), dtype=jnp.float32)
    w_qkv = 0.02 * jax.random.normal(kq, (D, 3 * D), dtype=jnp.float32)
    w_proj = 0.02 * jax.random.normal(kp, (D, D), dtype=jnp.float32)
    b_proj = 0.02 * jax.random.normal(kb, (D,), dtype=jnp.float32)

    out = attention_subsample_forward(x, w_qkv, w_proj, b_proj, num_heads)
    out = jax.block_until_ready(out)

    ref = reference_forward(x, w_qkv, w_proj, b_proj, num_heads)
    assert out.shape == (N, T, S, D)
    max_err = float(jnp.max(jnp.abs(out - ref)))
    # bf16 MXU path vs f32 "highest" reference -> slightly looser tolerance.
    assert bool(jnp.allclose(out, ref, atol=5e-3, rtol=5e-3)), max_err

    print("KERNEL_OK")
</pallas_src>

<mosaic_0001>
module attributes {stable_mosaic.version = 11 : i64} {
  func.func @_qkv_subsample_kernel(%arg0: i32, %arg1: memref<32x128xf32, #tpu.memory_space<vmem>>, %arg2: memref<64x192xbf16, #tpu.memory_space<vmem>>, %arg3: memref<32x128xbf16, #tpu.memory_space<vmem>>, %arg4: memref<32x64xbf16, #tpu.memory_space<vmem>>, %arg5: memref<32x64xbf16, #tpu.memory_space<vmem>>) attributes {dimension_semantics = [#tpu.dimension_semantics<parallel>], iteration_bounds = array<i64: 1>, scalar_prefetch = 0 : i64, scratch_operands = 0 : i64, tpu.core_type = #tpu.core_type<tc>, window_params = [{transform_indices = @transform_0, window_bounds = array<i64: 32, 128>}, {pipeline_mode = #tpu.pipeline_mode<synchronous>, transform_indices = @transform_1, window_bounds = array<i64: 64, 192>}, {transform_indices = @transform_2, window_bounds = array<i64: 32, 128>}, {transform_indices = @transform_3, window_bounds = array<i64: 32, 64>}, {transform_indices = @transform_4, window_bounds = array<i64: 32, 64>}]} {
    %c0 = arith.constant 0 : index
    %c0_0 = arith.constant 0 : index
    %0 = vector.load %arg2[%c0, %c0_0] : memref<64x192xbf16, #tpu.memory_space<vmem>>, vector<64x192xbf16>
    %c0_1 = arith.constant 0 : index
    %c0_2 = arith.constant 0 : index
    %1 = vector.load %arg1[%c0_1, %c0_2] : memref<32x128xf32, #tpu.memory_space<vmem>>, vector<32x64xf32>
    %2 = arith.truncf %1 : vector<32x64xf32> to vector<32x64xbf16>
    %c0_3 = arith.constant 0 : index
    %c64 = arith.constant 64 : index
    %3 = vector.load %arg1[%c0_3, %c64] : memref<32x128xf32, #tpu.memory_space<vmem>>, vector<32x64xf32>
    %4 = arith.truncf %3 : vector<32x64xf32> to vector<32x64xbf16>
    %cst = arith.constant dense<0.000000e+00> : vector<32x192xf32>
    %5 = tpu.matmul %2, %0, %cst {dimension_numbers = #tpu.dot_dimension_numbers<[1], [0], [0], [1], [0, 0, 1, 1], [], []>} : vector<32x64xbf16>, vector<64x192xbf16>, vector<32x192xf32> -> vector<32x192xf32>
    %6 = vector.extract_strided_slice %0 {offsets = [0, 0], sizes = [64, 64], strides = [1, 1]} : vector<64x192xbf16> to vector<64x64xbf16>
    %cst_4 = arith.constant dense<0.000000e+00> : vector<32x64xf32>
    %7 = tpu.matmul %4, %6, %cst_4 {dimension_numbers = #tpu.dot_dimension_numbers<[1], [0], [0], [1], [0, 0, 1, 1], [], []>} : vector<32x64xbf16>, vector<64x64xbf16>, vector<32x64xf32> -> vector<32x64xf32>
    %8 = vector.extract_strided_slice %5 {offsets = [0, 0], sizes = [32, 64], strides = [1, 1]} : vector<32x192xf32> to vector<32x64xf32>
    %9 = arith.truncf %8 : vector<32x64xf32> to vector<32x64xbf16>
    %c0_5 = arith.constant 0 : index
    %c0_6 = arith.constant 0 : index
    %10 = vector.load %arg3[%c0_5, %c0_6] : memref<32x128xbf16, #tpu.memory_space<vmem>>, vector<32x64xbf16>
    tpu.vector_store %arg3[%c0_5, %c0_6], %9 {strides = array<i32>} : memref<32x128xbf16, #tpu.memory_space<vmem>>, vector<32x64xbf16>,
    %11 = arith.truncf %7 : vector<32x64xf32> to vector<32x64xbf16>
    %c0_7 = arith.constant 0 : index
    %c64_8 = arith.constant 64 : index
    %12 = vector.load %arg3[%c0_7, %c64_8] : memref<32x128xbf16, #tpu.memory_space<vmem>>, vector<32x64xbf16>
    tpu.vector_store %arg3[%c0_7, %c64_8], %11 {strides = array<i32>} : memref<32x128xbf16, #tpu.memory_space<vmem>>, vector<32x64xbf16>,
    %13 = vector.extract_strided_slice %5 {offsets = [0, 64], sizes = [32, 64], strides = [1, 1]} : vector<32x192xf32> to vector<32x64xf32>
    %14 = arith.truncf %13 : vector<32x64xf32> to vector<32x64xbf16>
    %c0_9 = arith.constant 0 : index
    %c0_10 = arith.constant 0 : index
    %15 = vector.load %arg4[%c0_9, %c0_10] : memref<32x64xbf16, #tpu.memory_space<vmem>>, vector<32x64xbf16>
    tpu.vector_store %arg4[%c0_9, %c0_10], %14 {strides = array<i32>} : memref<32x64xbf16, #tpu.memory_space<vmem>>, vector<32x64xbf16>,
    %16 = vector.extract_strided_slice %5 {offsets = [0, 128], sizes = [32, 64], strides = [1, 1]} : vector<32x192xf32> to vector<32x64xf32>
    %17 = arith.truncf %16 : vector<32x64xf32> to vector<32x64xbf16>
    %c0_11 = arith.constant 0 : index
    %c0_12 = arith.constant 0 : index
    %18 = vector.load %arg5[%c0_11, %c0_12] : memref<32x64xbf16, #tpu.memory_space<vmem>>, vector<32x64xbf16>
    tpu.vector_store %arg5[%c0_11, %c0_12], %17 {strides = array<i32>} : memref<32x64xbf16, #tpu.memory_space<vmem>>, vector<32x64xbf16>,
    return
  }
  func.func @transform_0(%arg0: i32) -> (i32, i32) {
    %c0_i32 = arith.constant 0 : i32
    %c0_i32_0 = arith.constant 0 : i32
    return %arg0, %c0_i32 : i32, i32
  }
  func.func @transform_1(%arg0: i32) -> (i32, i32) {
    %c0_i32 = arith.constant 0 : i32
    %c0_i32_0 = arith.constant 0 : i32
    %c0_i32_1 = arith.constant 0 : i32
    return %c0_i32, %c0_i32_0 : i32, i32
  }
  func.func @transform_2(%arg0: i32) -> (i32, i32) {
    %c0_i32 = arith.constant 0 : i32
    %c0_i32_0 = arith.constant 0 : i32
    return %arg0, %c0_i32 : i32, i32
  }
  func.func @transform_3(%arg0: i32) -> (i32, i32) {
    %c0_i32 = arith.constant 0 : i32
    %c0_i32_0 = arith.constant 0 : i32
    return %arg0, %c0_i32 : i32, i32
  }
  func.func @transform_4(%arg0: i32) -> (i32, i32) {
    %c0_i32 = arith.constant 0 : i32
    %c0_i32_0 = arith.constant 0 : i32
    return %arg0, %c0_i32 : i32, i32
  }
}

</mosaic_0001>

<llo_original>
// kernel: tpu_custom_call.1
$region0: #{tpu_custom_call.1}
  #allocation0 [shape = 'u32[]', space=smem, size = 0x4, offset = 0x4, fixed_abs, tag = 'smem constant byte address 0x4 - core index']
  #allocation1 [shape = 'u32[144,128]{1,0:T(1,128)}', space=vmem, size = 0x12000, scoped, tag = 'internal scratch']
  %s0 = inlined_call_operand.hbm [shape: f32[32,128], index: 0, kind: input, shape index: {}]
  %s1 = inlined_call_operand.hbm [shape: bf16[64,192], index: 1, kind: input, shape index: {}]
  %s2 = inlined_call_operand.hbm [shape: bf16[32,128], index: 2, kind: output, shape index: {0}]
  %s3 = inlined_call_operand.hbm [shape: bf16[32,64], index: 3, kind: output, shape index: {1}]
  %s4 = inlined_call_operand.hbm [shape: bf16[32,64], index: 4, kind: output, shape index: {2}]
  %5 = xla_tuple %s2, %s3, %s4
  %s6 = sld [smem:[#allocation0]]
  $region42: #{tpu_custom_call.1} parent=0
    _
  %s8 = ssub.s32 1, %s6
  %s9 = scalar_select 0, %s8, %s6
  $region1: #{tpu_custom_call.1} parent=0
    #allocation2 [shape = 'u8[16384]{0}', space=vmem, size = 0x4000, scoped, tag = 'input window, operand 0, single buffered']
    #allocation3 [shape = 's32[1]{0}', space=sflag, size = 0x4, scoped, tag = 'scoped memory for tpu_custom_call.1']
    #allocation4 [shape = 's32[1]{0}', space=sflag, size = 0x4, scoped, tag = 'scoped memory for tpu_custom_call.1']
    #allocation5 [shape = 'u8[32768]{0}', space=vmem, size = 0x8000, scoped, tag = 'input window, operand 1, single buffered']
    #allocation6 [shape = 's32[1]{0}', space=sflag, size = 0x4, scoped, tag = 'scoped memory for tpu_custom_call.1']
    #allocation7 [shape = 'u8[8192]{0}', space=vmem, size = 0x2000, scoped, tag = 'output window, operand 0, single buffered']
    #allocation8 [shape = 'u8[8192]{0}', space=vmem, size = 0x2000, scoped, tag = 'output window, operand 1, single buffered']
    #allocation9 [shape = 's32[1]{0}', space=sflag, size = 0x4, scoped, tag = 'scoped memory for tpu_custom_call.1']
    #allocation10 [shape = 'u8[8192]{0}', space=vmem, size = 0x2000, scoped, tag = 'output window, operand 2, single buffered']
    %10 = vsyncpa [#allocation3], 0
    %11 = vsyncpa [#allocation6], 0
    %12 = vsyncpa [#allocation4], 0
    %13 = vsyncpa [#allocation9], 0
    // Predicated region
    $region2: #{tpu_custom_call.1} parent=1 // pred_check
      _
    $region3: #{tpu_custom_call.1} parent=1 // pred_check_branch
      %15 = sbr.rel (0) target = $region5
    $region4: #{tpu_custom_call.1} parent=1 // pred_region
      %s17 = ssub.s32 512, 512
      %18 = vsyncadd [#allocation3], %s17
      %s19 = sshll.u32 [#allocation2], 4
      %s20 = int_to_ptr.vmem [resolvable:$true] %s19
      %25 = dma.hbm_to_vmem [thread:$0]  %s0, 512, %s20, [#allocation3], 128, 128, 8
    $region5: #{tpu_custom_call.1} parent=1 // pred_fallthru
      _
    // Predicated region
    $region6: #{tpu_custom_call.1} parent=1 // pred_check
      _
    $region7: #{tpu_custom_call.1} parent=1 // pred_check_branch
      %27 = sbr.rel (0) target = $region9
    $region8: #{tpu_custom_call.1} parent=1 // pred_region
      %s29 = ssub.s32 1024, 1024
      %30 = vsyncadd [#allocation6], %s29
      %s31 = sshll.u32 [#allocation5], 4
      %s32 = int_to_ptr.vmem [resolvable:$true] %s31
      %37 = dma.hbm_to_vmem [thread:$0]  %s1, 1024, %s32, [#allocation6], 128, 128, 8
    $region9: #{tpu_custom_call.1} parent=1 // pred_fallthru
      _
    // Predicated region
    $region10: #{tpu_custom_call.1} parent=1 // pred_check
      _
    $region11: #{tpu_custom_call.1} parent=1 // pred_check_branch
      %39 = sbr.rel (0) target = $region13
    $region12: #{tpu_custom_call.1} parent=1 // pred_region
      %40 = dma.done [#allocation3], 512
    $region13: #{tpu_custom_call.1} parent=1 // pred_fallthru
      _
    // Predicated region
    $region14: #{tpu_custom_call.1} parent=1 // pred_check
      _
    $region15: #{tpu_custom_call.1} parent=1 // pred_check_branch
      %42 = sbr.rel (0) target = $region17
    $region16: #{tpu_custom_call.1} parent=1 // pred_region
      %43 = dma.done [#allocation6], 1024
    $region17: #{tpu_custom_call.1} parent=1 // pred_fallthru
      _
    %v45 = vld [vmem:[#allocation5] sm:$0xff]
    %v46 = vld [vmem:[#allocation5 + $0x8] sm:$0xff]
    %v47 = vld [vmem:[#allocation5 + $0x10] sm:$0xff]
    %v48 = vld [vmem:[#allocation5 + $0x18] sm:$0xff]
    %v49 = vld [vmem:[#allocation5 + $0x20] sm:$0xff]
    %v50 = vld [vmem:[#allocation5 + $0x28] sm:$0xff]
    %v51 = vld [vmem:[#allocation5 + $0x30] sm:$0xff]
    %v52 = vld [vmem:[#allocation5 + $0x38] sm:$0xff]
    %v53 = vld [vmem:[#allocation2] sm:$0xff]
    %v54 = vld [vmem:[#allocation2 + $0x8] sm:$0xff]
    %v55 = vld [vmem:[#allocation2 + $0x10] sm:$0xff]
    %v56 = vld [vmem:[#allocation2 + $0x18] sm:$0xff]
    %v57 = vpack.c.bf16 %v54, %v53
    %v58 = vpack.c.bf16 %v56, %v55
    %v67 = vunpack.c.l.b16 %v45
    %v68 = vunpack.c.h.b16 %v45
    %v69 = vunpack.c.l.b16 %v46
    %v70 = vunpack.c.h.b16 %v46
    %v71 = vunpack.c.l.b16 %v47
    %v72 = vunpack.c.h.b16 %v47
    %v73 = vunpack.c.l.b16 %v48
    %v74 = vunpack.c.h.b16 %v48
    %v75 = vunpack.c.l.b16 %v49
    %v76 = vunpack.c.h.b16 %v49
    %v77 = vunpack.c.l.b16 %v50
    %v78 = vunpack.c.h.b16 %v50
    %v79 = vunpack.c.l.b16 %v51
    %v80 = vunpack.c.h.b16 %v51
    %v81 = vunpack.c.l.b16 %v52
    %v82 = vunpack.c.h.b16 %v52
    %v83 = vpack.c.b16 %v69, %v67
    %v84 = vpack.c.b16 %v70, %v68
    %v85 = vpack.c.b16 %v73, %v71
    %v86 = vpack.c.b16 %v74, %v72
    %v87 = vpack.c.b16 %v77, %v75
    %v88 = vpack.c.b16 %v78, %v76
    %v89 = vpack.c.b16 %v81, %v79
    %v90 = vpack.c.b16 %v82, %v80
    %vm99 = vcmask 523264
    %v101 = vsel %vm99, %v57, 0
    %v104 = vsel %vm99, %v58, 0
    %106 = vmatprep.subr.bf16.mxu0 0
    %107 = vmatpush1.bf16.msra.mxu0 0
    %108 = vmatprep.subr.bf16.mxu0 0
    %109 = vmatpush1.bf16.msra.mxu0 0
    %110 = vmatprep.subr.bf16.mxu0 0
    %111 = vmatpush1.bf16.msra.mxu0 0
    %112 = vmatprep.subr.bf16.mxu0 0
    %113 = vmatpush1.bf16.msra.mxu0 0
    %114 = vmatprep.subr.bf16.mxu0 %v90
    %115 = vmatpush1.bf16.msra.mxu0 %v89
    %116 = vmatprep.subr.bf16.mxu0 %v88
    %117 = vmatpush1.bf16.msra.mxu0 %v87
    %118 = vmatprep.subr.bf16.mxu0 %v86
    %119 = vmatpush1.bf16.msra.mxu0 %v85
    %120 = vmatprep.subr.bf16.mxu0 %v84
    %121 = vmatpush1.bf16.msra.mxu0 %v83
    %122 = vmatprep.subr.bf16.mxu0 0
    %123 = vmatpush2.bf16.msra.mxu0 0
    %124 = vmatprep.subr.bf16.mxu0 0
    %125 = vmatpush2.bf16.msra.mxu0 0
    %126 = vmatprep.subr.bf16.mxu0 0
    %127 = vmatpush2.bf16.msra.mxu0 0
    %128 = vmatprep.subr.bf16.mxu0 0
    %129 = vmatpush2.bf16.msra.mxu0 0
    %130 = vmatprep.subr.bf16.mxu0 0
    %131 = vmatpush2.bf16.msra.mxu0 0
    %132 = vmatprep.subr.bf16.mxu0 0
    %133 = vmatpush2.bf16.msra.mxu0 0
    %134 = vmatprep.subr.bf16.mxu0 0
    %135 = vmatpush2.bf16.msra.mxu0 0
    %136 = vmatprep.subr.bf16.mxu0 0
    %137 = vmatpush2.bf16.msra.mxu0 0
    %138 = vmatprep.mubr.bf16.mxu0 0
    %139 = vmatmul.mubr.bf16.gmra.mxu0 %v101
    %v140 = vpop.f32.mrf.mxu0
    %v141 = vadd.f32 0.0, %v140
    %v142 = vpop.f32.mrf.mxu0
    %v143 = vadd.f32 0.0, %v142
    %v144 = vpop.f32.mrf.mxu0
    %v145 = vadd.f32 0.0, %v144
    %v146 = vpop.f32.mrf.mxu0
    %v147 = vadd.f32 0.0, %v146
    %148 = vmatprep.mubr.bf16.mxu0 0
    %149 = vmatmul.mubr.bf16.gmra.mxu0 %v104
    %v150 = vpop.f32.mrf.mxu0
    %v151 = vadd.f32 0.0, %v150
    %v152 = vpop.f32.mrf.mxu0
    %v153 = vadd.f32 0.0, %v152
    %v154 = vpop.f32.mrf.mxu0
    %v155 = vadd.f32 0.0, %v154
    %v156 = vpop.f32.mrf.mxu0
    %v157 = vadd.f32 0.0, %v156
    %158 = vdwg.mxu0
    %161 = vrot.lane.b32.xlu0 %v57, 64
    %v162 = vpop.permute.xlu0 %161
    %163 = vrot.lane.b32.xlu0 %v58, 64
    %v164 = vpop.permute.xlu0 %163
    %v166 = vsel %vm99, %v162, 0
    %v169 = vsel %vm99, %v164, 0
    %171 = vmatprep.subr.bf16.mxu0 0
    %172 = vmatpush1.bf16.msra.mxu0 0
    %173 = vmatprep.subr.bf16.mxu0 0
    %174 = vmatpush1.bf16.msra.mxu0 0
    %175 = vmatprep.subr.bf16.mxu0 0
    %176 = vmatpush1.bf16.msra.mxu0 0
    %177 = vmatprep.subr.bf16.mxu0 0
    %178 = vmatpush1.bf16.msra.mxu0 0
    %179 = vmatprep.subr.bf16.mxu0 0
    %180 = vmatpush1.bf16.msra.mxu0 %v89
    %181 = vmatprep.subr.bf16.mxu0 0
    %182 = vmatpush1.bf16.msra.mxu0 %v87
    %183 = vmatprep.subr.bf16.mxu0 0
    %184 = vmatpush1.bf16.msra.mxu0 %v85
    %185 = vmatprep.subr.bf16.mxu0 0
    %186 = vmatpush1.bf16.msra.mxu0 %v83
    %187 = vmatprep.subr.bf16.mxu0 0
    %188 = vmatpush2.bf16.msra.mxu0 0
    %189 = vmatprep.subr.bf16.mxu0 0
    %190 = vmatpush2.bf16.msra.mxu0 0
    %191 = vmatprep.subr.bf16.mxu0 0
    %192 = vmatpush2.bf16.msra.mxu0 0
    %193 = vmatprep.subr.bf16.mxu0 0
    %194 = vmatpush2.bf16.msra.mxu0 0
    %195 = vmatprep.subr.bf16.mxu0 0
    %196 = vmatpush2.bf16.msra.mxu0 0
    %197 = vmatprep.subr.bf16.mxu0 0
    %198 = vmatpush2.bf16.msra.mxu0 0
    %199 = vmatprep.subr.bf16.mxu0 0
    %200 = vmatpush2.bf16.msra.mxu0 0
    %201 = vmatprep.subr.bf16.mxu0 0
    %202 = vmatpush2.bf16.msra.mxu0 0
    %203 = vmatprep.mubr.bf16.mxu0 0
    %204 = vmatmul.mubr.bf16.gmra.mxu0 %v166
    %v205 = vpop.f32.mrf.mxu0
    %v206 = vadd.f32 0.0, %v205
    %v207 = vpop.f32.mrf.mxu0
    %v208 = vpop.f32.mrf.mxu0
    %v209 = vadd.f32 0.0, %v208
    %v210 = vpop.f32.mrf.mxu0
    %211 = vmatprep.mubr.bf16.mxu0 0
    %212 = vmatmul.mubr.bf16.gmra.mxu0 %v169
    %v213 = vpop.f32.mrf.mxu0
    %v214 = vadd.f32 0.0, %v213
    %v215 = vpop.f32.mrf.mxu0
    %v216 = vpop.f32.mrf.mxu0
    %v217 = vadd.f32 0.0, %v216
    %v218 = vpop.f32.mrf.mxu0
    %219 = vdwg.mxu0
    %v220 = vpack.c.bf16 %v145, %v141
    %v221 = vpack.c.bf16 %v155, %v151
    %v224 = vunpack.c.l.b16 %v220
    %v225 = vunpack.c.h.b16 %v220
    %v226 = vunpack.c.l.b16 %v221
    %v227 = vunpack.c.h.b16 %v221
    %v228 = vpack.c.b16 %v224, %v224
    %v229 = vpack.c.b16 %v225, %v225
    %v230 = vpack.c.b16 %v226, %v226
    %v231 = vpack.c.b16 %v227, %v227
    %vm236 = vcmask 519168
    %237 = vst.msk [vmem:[#allocation7] sm:$0xf] %vm236, %v228
    %238 = vst.msk [vmem:[#allocation7 + $0x4] sm:$0xf] %vm236, %v229
    %239 = vst.msk [vmem:[#allocation7 + $0x8] sm:$0xf] %vm236, %v230
    %240 = vst.msk [vmem:[#allocation7 + $0xc] sm:$0xf] %vm236, %v231
    %v241 = vpack.c.bf16 %v209, %v206
    %v242 = vpack.c.bf16 %v217, %v214
    %v245 = vunpack.c.l.b16 %v241
    %v246 = vunpack.c.h.b16 %v241
    %v247 = vunpack.c.l.b16 %v242
    %v248 = vunpack.c.h.b16 %v242
    %v249 = vpack.c.b16 %v245, %v245
    %v250 = vpack.c.b16 %v246, %v246
    %v251 = vpack.c.b16 %v247, %v247
    %v252 = vpack.c.b16 %v248, %v248
    %253 = vrot.lane.b32.xlu0 %v249, 64
    %v254 = vpop.permute.xlu0 %253
    %255 = vrot.lane.b32.xlu0 %v250, 64
    %v256 = vpop.permute.xlu0 %255
    %257 = vrot.lane.b32.xlu0 %v251, 64
    %v258 = vpop.permute.xlu0 %257
    %259 = vrot.lane.b32.xlu0 %v252, 64
    %v260 = vpop.permute.xlu0 %259
    %vm265 = vcmask 1043968
    %266 = vst.msk [vmem:[#allocation7] sm:$0xf] %vm265, %v254
    %267 = vst.msk [vmem:[#allocation7 + $0x4] sm:$0xf] %vm265, %v256
    %268 = vst.msk [vmem:[#allocation7 + $0x8] sm:$0xf] %vm265, %v258
    %269 = vst.msk [vmem:[#allocation7 + $0xc] sm:$0xf] %vm265, %v260
    %270 = vrot.lane.b32.xlu0 %v228, 64
    %v271 = vpop.permute.xlu0 %270
    %272 = vrot.lane.b32.xlu0 %v229, 64
    %v273 = vpop.permute.xlu0 %272
    %274 = vrot.lane.b32.xlu0 %v230, 64
    %v275 = vpop.permute.xlu0 %274
    %276 = vrot.lane.b32.xlu0 %v231, 64
    %v277 = vpop.permute.xlu0 %276
    %282 = vst.msk [vmem:[#allocation8] sm:$0xf] %vm236, %v271
    %283 = vst.msk [vmem:[#allocation8 + $0x4] sm:$0xf] %vm236, %v273
    %284 = vst.msk [vmem:[#allocation8 + $0x8] sm:$0xf] %vm236, %v275
    %285 = vst.msk [vmem:[#allocation8 + $0xc] sm:$0xf] %vm236, %v277
    %v286 = vpack.c.bf16 %v147, %v143
    %v287 = vpack.c.bf16 %v157, %v153
    %v290 = vunpack.c.l.b16 %v286
    %v291 = vunpack.c.h.b16 %v286
    %v292 = vunpack.c.l.b16 %v287
    %v293 = vunpack.c.h.b16 %v287
    %v294 = vpack.c.b16 %v290, %v290
    %v295 = vpack.c.b16 %v291, %v291
    %v296 = vpack.c.b16 %v292, %v292
    %v297 = vpack.c.b16 %v293, %v293
    %302 = vst.msk [vmem:[#allocation10] sm:$0xf] %vm236, %v294
    %303 = vst.msk [vmem:[#allocation10 + $0x4] sm:$0xf] %vm236, %v295
    %304 = vst.msk [vmem:[#allocation10 + $0x8] sm:$0xf] %vm236, %v296
    %305 = vst.msk [vmem:[#allocation10 + $0xc] sm:$0xf] %vm236, %v297
    // Predicated region
    $region18: #{tpu_custom_call.1} parent=1 // pred_check
      _
    $region19: #{tpu_custom_call.1} parent=1 // pred_check_branch
      %307 = sbr.rel (0) target = $region21
    $region20: #{tpu_custom_call.1} parent=1 // pred_region
      %s309 = ssub.s32 256, 256
      %310 = vsyncadd [#allocation4], %s309
      %s311 = sshll.u32 [#allocation7], 4
      %s312 = int_to_ptr.vmem [resolvable:$true] %s311
      %317 = dma.vmem_to_hbm [thread:$0]  %s312, 256, %s2, [#allocation4], 64, 64, 4
    $region21: #{tpu_custom_call.1} parent=1 // pred_fallthru
      _
    // Predicated region
    $region22: #{tpu_custom_call.1} parent=1 // pred_check
      _
    $region23: #{tpu_custom_call.1} parent=1 // pred_check_branch
      %319 = sbr.rel (0) target = $region25
    $region24: #{tpu_custom_call.1} parent=1 // pred_region
      %s321 = ssub.s32 256, 256
      %322 = vsyncadd [#allocation9], %s321
      %s323 = sshll.u32 [#allocation8], 4
      %s324 = int_to_ptr.vmem [resolvable:$true] %s323
      %329 = dma.vmem_to_hbm [thread:$0]  %s324, 256, %s3, [#allocation9], 64, 64, 4
    $region25: #{tpu_custom_call.1} parent=1 // pred_fallthru
      _
    // Predicated region
    $region26: #{tpu_custom_call.1} parent=1 // pred_check
      _
    $region27: #{tpu_custom_call.1} parent=1 // pred_check_branch
      %331 = sbr.rel (0) target = $region29
    $region28: #{tpu_custom_call.1} parent=1 // pred_region
      %s333 = ssub.s32 256, 256
      %334 = vsyncadd [#allocation9], %s333
      %s335 = sshll.u32 [#allocation10], 4
      %s336 = int_to_ptr.vmem [resolvable:$true] %s335
      %341 = dma.vmem_to_hbm [thread:$0]  %s336, 256, %s4, [#allocation9], 64, 64, 4
    $region29: #{tpu_custom_call.1} parent=1 // pred_fallthru
      _
    // Predicated region
    $region30: #{tpu_custom_call.1} parent=1 // pred_check
      _
    $region31: #{tpu_custom_call.1} parent=1 // pred_check_branch
      %343 = sbr.rel (0) target = $region33
    $region32: #{tpu_custom_call.1} parent=1 // pred_region
      %344 = dma.done [#allocation4], 256
    $region33: #{tpu_custom_call.1} parent=1 // pred_fallthru
      _
    // Predicated region
    $region34: #{tpu_custom_call.1} parent=1 // pred_check
      _
    $region35: #{tpu_custom_call.1} parent=1 // pred_check_branch
      %346 = sbr.rel (0) target = $region37
    $region36: #{tpu_custom_call.1} parent=1 // pred_region
      %347 = dma.done [#allocation9], 256
    $region37: #{tpu_custom_call.1} parent=1 // pred_fallthru
      _
    // Predicated region
    $region38: #{tpu_custom_call.1} parent=1 // pred_check
      _
    $region39: #{tpu_custom_call.1} parent=1 // pred_check_branch
      %349 = sbr.rel (0) target = $region41
    $region40: #{tpu_custom_call.1} parent=1 // pred_region
      %350 = dma.done [#allocation9], 256
    $region41: #{tpu_custom_call.1} parent=1 // pred_fallthru
      _
    %351 = vsyncpa [#allocation3], 1
    %352 = vsyncpa [#allocation6], 1
    %353 = vsyncpa [#allocation4], 1
    %354 = vsyncpa [#allocation9], 1

</llo_original>
